<compile_context>
chip_gen: v5e
topology: v5e:2x2
jax: 0.10.0
libtpu: 0.0.40
codegen_flags: <defaults>
</compile_context>

<pallas_src>
import jax
import jax.numpy as jnp
from jax.experimental import pallas as pl
from jax.experimental.pallas import tpu as pltpu

# ---------------------------------------------------------------------------
# Problem sizes (small, consistent with an image encoder forward pass)
# ---------------------------------------------------------------------------
B, CIN, H, W = 2, 4, 16, 16        # input: NCHW [2, 4, 16, 16]
KH, KW = 3, 3                      # conv kernel
COUT = 8                           # encoder.out_channels
HIDDEN = 32                        # final_mlp hidden width
NCLS = 10                          # final_mlp output width
RANGE_MAX = 100.0                  # normalize_input range_max

OH, OW = H - KH + 1, W - KW + 1    # 14, 14  (valid conv)
NPIX = OH * OW                     # 196 pixels per image
NROWS = B * NPIX                   # 392 im2col rows
KDIM = KH * KW * CIN               # 36  contraction depth

# Padded, tile-aligned sizes used inside the kernel
NROWS_PAD = 512                    # lane dim of the transposed patches
KDIM_PAD = 48                      # contraction depth, bf16 sublane aligned
BPAD = 8                           # padded batch rows for full-tile output
OUT_LANES = 128                    # padded output lanes

# Packed-parameter layout: one [72, 128] f32 buffer, 8-row-aligned blocks.
PACK_LANES = 128
R_WC = 0                           # scaled conv weight^T [COUT, KDIM]   rows 0:8
R_BC = 8                           # conv bias (column)   [COUT, 1]      rows 8:16
R_W1 = 16                          # mlp w1               [COUT, HIDDEN] rows 16:24
R_B1 = 24                          # mlp b1               [1, HIDDEN]    row 24
R_W2 = 32                          # mlp w2 (lane-padded) [HIDDEN, 128]  rows 32:64
R_B2 = 64                          # mlp b2 (lane-padded) [1, 128]       row 64
PACK_ROWS = 72


# ---------------------------------------------------------------------------
# Pallas kernel: entire forward pass, everything VMEM-resident, no grid
# ---------------------------------------------------------------------------
def model_kernel(patches_ref, params_ref, o_ref):
    # TODO(synk): `process_input` / `name_appendix` are abstract in the PyTorch
    # module; the concrete normalize_input(x, 100) is folded into the conv
    # weights (conv is linear in x), so no per-element scaling runs here.

    # --- Encoder conv as ONE lane-dense MXU matmul (bf16 in, f32 accum) ----
    wcs = params_ref[R_WC:R_WC + COUT, 0:KDIM_PAD].astype(jnp.bfloat16)   # [8, 48]
    acc_t = jnp.dot(wcs, patches_ref[...],
                    preferred_element_type=jnp.float32)                   # [8, 512]
    bc = params_ref[R_BC:R_BC + COUT, 0:1]                                # [8, 1]
    acc_t = jnp.maximum(acc_t + bc, 0.0)                                  # lane-dense ReLU

    # --- Global average pool: static block-diagonal pool matrix built with
    #     lane-index comparisons (no int32 divide); exact zeros on padded
    #     columns (>= NROWS) and padded batch rows (>= B).
    r_idx = jax.lax.broadcasted_iota(jnp.int32, (BPAD, NROWS_PAD), 1)
    b_idx = jax.lax.broadcasted_iota(jnp.int32, (BPAD, NROWS_PAD), 0)
    in_batch = ((r_idx >= b_idx * NPIX) & (r_idx < (b_idx + 1) * NPIX)
                & (b_idx < B))
    pool = jnp.where(in_batch, jnp.float32(1.0 / NPIX), jnp.float32(0.0))  # [8, 512]

    # feat[b, c] = sum_r pool[b, r] * acc_t[c, r]   (rhs-transposed contraction)
    feat = jax.lax.dot_general(pool, acc_t, (((1,), (1,)), ((), ())),
                               preferred_element_type=jnp.float32)         # [8, 8]

    # --- final_mlp: Linear -> ReLU -> Linear (tiny, single MXU passes) -----
    w1 = params_ref[R_W1:R_W1 + COUT, 0:HIDDEN]                            # [8, 32]
    b1 = params_ref[R_B1:R_B1 + 1, 0:HIDDEN]                               # [1, 32]
    hidden = jnp.maximum(
        jnp.dot(feat, w1, preferred_element_type=jnp.float32) + b1, 0.0)   # [8, 32]

    w2 = params_ref[R_W2:R_W2 + HIDDEN, :]                                 # [32, 128]
    b2 = params_ref[R_B2:R_B2 + 1, :]                                      # [1, 128]
    # Full [8, 128] tile -> unmasked store; live result sits in [:B, :NCLS].
    o_ref[...] = jnp.dot(hidden, w2, preferred_element_type=jnp.float32) + b2


# ---------------------------------------------------------------------------
# One-time parameter packing (outside the per-call path)
# ---------------------------------------------------------------------------
def build_packed_params(wc, bc, w1, b1, w2, b2):
    """Fold 1/RANGE_MAX into the conv weights and pack everything into a
    single [72, 128] f32 buffer. Run once at init, not per forward."""
    # wc is OIHW [COUT, CIN, KH, KW] (PyTorch Conv2d layout).
    wcs_t = (wc.astype(jnp.float32) / RANGE_MAX).transpose(0, 2, 3, 1)     # [COUT,KH,KW,CIN]
    wcs_t = wcs_t.reshape(COUT, KDIM)                                      # [8, 36]

    buf = jnp.zeros((PACK_ROWS, PACK_LANES), jnp.float32)
    buf = buf.at[R_WC:R_WC + COUT, 0:KDIM].set(wcs_t)
    buf = buf.at[R_BC:R_BC + COUT, 0].set(bc.reshape(COUT).astype(jnp.float32))
    buf = buf.at[R_W1:R_W1 + COUT, 0:HIDDEN].set(w1.astype(jnp.float32))
    buf = buf.at[R_B1, 0:HIDDEN].set(b1.reshape(HIDDEN).astype(jnp.float32))
    buf = buf.at[R_W2:R_W2 + HIDDEN, 0:NCLS].set(w2.astype(jnp.float32))
    buf = buf.at[R_B2, 0:NCLS].set(b2.reshape(NCLS).astype(jnp.float32))
    return buf


# ---------------------------------------------------------------------------
# Per-call wrapper: transposed lane-dense im2col, then one pallas_call
# ---------------------------------------------------------------------------
@jax.jit
def model_forward(x_nchw, packed_params):
    x = x_nchw.astype(jnp.float32)                                         # NCHW

    # Transposed im2col directly from the 9-tap stack (stays in NCHW — no
    # channel-last transpose needed): rows = (dy, dx, cin), lanes = (b, oh, ow).
    taps = jnp.stack([x[:, :, dy:dy + OH, dx:dx + OW]
                      for dy in range(KH) for dx in range(KW)], axis=0)    # [9,B,CIN,OH,OW]
    patches_t = taps.transpose(0, 2, 1, 3, 4).reshape(KDIM, NROWS)         # [36, 392]
    patches_t = jnp.pad(
        patches_t, ((0, KDIM_PAD - KDIM), (0, NROWS_PAD - NROWS))
    ).astype(jnp.bfloat16)                                                 # [48, 512] bf16

    vmem = pl.BlockSpec(memory_space=pltpu.MemorySpace.VMEM)
    out_pad = pl.pallas_call(
        model_kernel,
        out_shape=jax.ShapeDtypeStruct((BPAD, OUT_LANES), jnp.float32),
        in_specs=[vmem, vmem],
        out_specs=vmem,
        cost_estimate=pl.CostEstimate(
            flops=2 * (COUT * KDIM_PAD * NROWS_PAD
                       + BPAD * NROWS_PAD * COUT
                       + BPAD * COUT * HIDDEN
                       + BPAD * HIDDEN * OUT_LANES),
            transcendentals=0,
            bytes_accessed=(KDIM_PAD * NROWS_PAD * 2
                            + PACK_ROWS * PACK_LANES * 4
                            + BPAD * OUT_LANES * 4),
        ),
    )(patches_t, packed_params)

    return out_pad[:B, :NCLS]                                              # [2, 10]


# ---------------------------------------------------------------------------
# Pure-JAX reference (same math, f32 end to end) for a correctness check
# ---------------------------------------------------------------------------
def model_reference(x_nchw, params):
    wc, bc, w1, b1, w2, b2 = params
    x = x_nchw.astype(jnp.float32) / RANGE_MAX
    acc = jax.lax.conv_general_dilated(
        x, wc.astype(jnp.float32), window_strides=(1, 1), padding='VALID',
        dimension_numbers=('NCHW', 'OIHW', 'NCHW'))                        # [B,COUT,OH,OW]
    acc = jnp.maximum(acc + bc.reshape(1, COUT, 1, 1), 0.0)
    feat = jnp.mean(acc, axis=(2, 3))                                      # [B, COUT]
    hidden = jnp.maximum(feat @ w1 + b1, 0.0)
    return hidden @ w2 + b2


def init_params(key):
    ks = jax.random.split(key, 6)
    wc = 0.1 * jax.random.normal(ks[0], (COUT, CIN, KH, KW), jnp.float32)  # OIHW
    bc = 0.1 * jax.random.normal(ks[1], (1, COUT), jnp.float32)
    w1 = 0.1 * jax.random.normal(ks[2], (COUT, HIDDEN), jnp.float32)
    b1 = 0.1 * jax.random.normal(ks[3], (1, HIDDEN), jnp.float32)
    w2 = 0.1 * jax.random.normal(ks[4], (HIDDEN, NCLS), jnp.float32)
    b2 = 0.1 * jax.random.normal(ks[5], (1, NCLS), jnp.float32)
    return wc, bc, w1, b1, w2, b2


if __name__ == "__main__":
    key = jax.random.PRNGKey(0)
    kx, kp = jax.random.split(key)
    # Synthetic image-like input in [0, 100), PyTorch NCHW convention.
    x = 100.0 * jax.random.uniform(kx, (B, CIN, H, W), jnp.float32)
    params = init_params(kp)

    # One-time packing (and /RANGE_MAX fold) — hoisted off the call path.
    packed = jax.block_until_ready(build_packed_params(*params))

    out = model_forward(x, packed)
    out = jax.block_until_ready(out)

    ref = model_reference(x, params)
    assert out.shape == (B, NCLS)
    # bf16 MXU path for patches / conv weights -> relaxed tolerance.
    assert jnp.allclose(out, ref, atol=1e-2, rtol=1e-2), "mismatch vs reference"
    print("KERNEL_OK")
</pallas_src>

<mosaic_0001>
module attributes {stable_mosaic.version = 11 : i64} {
  func.func @model_kernel(%arg0: memref<48x512xbf16, #tpu.memory_space<vmem>>, %arg1: memref<72x128xf32, #tpu.memory_space<vmem>>, %arg2: memref<8x128xf32, #tpu.memory_space<vmem>>) attributes {dimension_semantics = [], scalar_prefetch = 0 : i64, scratch_operands = 0 : i64, tpu.core_type = #tpu.core_type<tc>} {
    %c0 = arith.constant 0 : index
    %c0_0 = arith.constant 0 : index
    %0 = vector.load %arg1[%c0, %c0_0] : memref<72x128xf32, #tpu.memory_space<vmem>>, vector<8x48xf32>
    %1 = arith.truncf %0 : vector<8x48xf32> to vector<8x48xbf16>
    %c0_1 = arith.constant 0 : index
    %c0_2 = arith.constant 0 : index
    %2 = vector.load %arg0[%c0_1, %c0_2] : memref<48x512xbf16, #tpu.memory_space<vmem>>, vector<48x512xbf16>
    %cst = arith.constant dense<0.000000e+00> : vector<8x512xf32>
    %3 = tpu.matmul %1, %2, %cst {dimension_numbers = #tpu.dot_dimension_numbers<[1], [0], [0], [1], [0, 0, 1, 1], [], []>} : vector<8x48xbf16>, vector<48x512xbf16>, vector<8x512xf32> -> vector<8x512xf32>
    %c8 = arith.constant 8 : index
    %c0_3 = arith.constant 0 : index
    %4 = vector.load %arg1[%c8, %c0_3] : memref<72x128xf32, #tpu.memory_space<vmem>>, vector<8x1xf32>
    %5 = vector.broadcast %4 : vector<8x1xf32> to vector<8x512xf32>
    %6 = arith.addf %3, %5 : vector<8x512xf32>
    %cst_4 = arith.constant 0.000000e+00 : f32
    %7 = vector.broadcast %cst_4 : f32 to vector<8x512xf32>
    %8 = arith.maximumf %6, %7 : vector<8x512xf32>
    %9 = tpu.iota {dimensions = array<i32: 1>} : vector<8x512xi32>
    %10 = tpu.iota {dimensions = array<i32: 0>} : vector<8x512xi32>
    %c196_i32 = arith.constant 196 : i32
    %11 = vector.broadcast %c196_i32 : i32 to vector<8x512xi32>
    %12 = arith.muli %10, %11 : vector<8x512xi32>
    %13 = arith.cmpi sge, %9, %12 : vector<8x512xi32>
    %c1_i32 = arith.constant 1 : i32
    %14 = vector.broadcast %c1_i32 : i32 to vector<8x512xi32>
    %15 = arith.addi %10, %14 : vector<8x512xi32>
    %c196_i32_5 = arith.constant 196 : i32
    %16 = vector.broadcast %c196_i32_5 : i32 to vector<8x512xi32>
    %17 = arith.muli %15, %16 : vector<8x512xi32>
    %18 = arith.cmpi slt, %9, %17 : vector<8x512xi32>
    %19 = arith.andi %13, %18 : vector<8x512xi1>
    %c2_i32 = arith.constant 2 : i32
    %20 = vector.broadcast %c2_i32 : i32 to vector<8x512xi32>
    %21 = arith.cmpi slt, %10, %20 : vector<8x512xi32>
    %22 = arith.andi %19, %21 : vector<8x512xi1>
    %cst_6 = arith.constant 0.00510204071 : f32
    %cst_7 = arith.constant 0.000000e+00 : f32
    %23 = vector.broadcast %cst_6 : f32 to vector<8x512xf32>
    %24 = vector.broadcast %cst_7 : f32 to vector<8x512xf32>
    %25 = arith.select %22, %23, %24 : vector<8x512xi1>, vector<8x512xf32>
    %cst_8 = arith.constant dense<0.000000e+00> : vector<8x8xf32>
    %26 = tpu.matmul %25, %8, %cst_8 {dimension_numbers = #tpu.dot_dimension_numbers<[1], [1], [0], [0], [0, 0, 1, 0], [], []>} : vector<8x512xf32>, vector<8x512xf32>, vector<8x8xf32> -> vector<8x8xf32>
    %c16 = arith.constant 16 : index
    %c0_9 = arith.constant 0 : index
    %27 = vector.load %arg1[%c16, %c0_9] : memref<72x128xf32, #tpu.memory_space<vmem>>, vector<8x32xf32>
    %c24 = arith.constant 24 : index
    %c0_10 = arith.constant 0 : index
    %28 = vector.load %arg1[%c24, %c0_10] : memref<72x128xf32, #tpu.memory_space<vmem>>, vector<1x32xf32>
    %cst_11 = arith.constant dense<0.000000e+00> : vector<8x32xf32>
    %29 = tpu.matmul %26, %27, %cst_11 {dimension_numbers = #tpu.dot_dimension_numbers<[1], [0], [0], [1], [0, 0, 1, 1], [], []>} : vector<8x8xf32>, vector<8x32xf32>, vector<8x32xf32> -> vector<8x32xf32>
    %30 = vector.broadcast %28 : vector<1x32xf32> to vector<8x32xf32>
    %31 = arith.addf %29, %30 : vector<8x32xf32>
    %cst_12 = arith.constant 0.000000e+00 : f32
    %32 = vector.broadcast %cst_12 : f32 to vector<8x32xf32>
    %33 = arith.maximumf %31, %32 : vector<8x32xf32>
    %c32 = arith.constant 32 : index
    %c0_13 = arith.constant 0 : index
    %34 = vector.load %arg1[%c32, %c0_13] : memref<72x128xf32, #tpu.memory_space<vmem>>, vector<32x128xf32>
    %c64 = arith.constant 64 : index
    %c0_14 = arith.constant 0 : index
    %35 = vector.load %arg1[%c64, %c0_14] : memref<72x128xf32, #tpu.memory_space<vmem>>, vector<1x128xf32>
    %cst_15 = arith.constant dense<0.000000e+00> : vector<8x128xf32>
    %36 = tpu.matmul %33, %34, %cst_15 {dimension_numbers = #tpu.dot_dimension_numbers<[1], [0], [0], [1], [0, 0, 1, 1], [], []>} : vector<8x32xf32>, vector<32x128xf32>, vector<8x128xf32> -> vector<8x128xf32>
    %37 = vector.broadcast %35 : vector<1x128xf32> to vector<8x128xf32>
    %38 = arith.addf %36, %37 : vector<8x128xf32>
    %c0_16 = arith.constant 0 : index
    %c0_17 = arith.constant 0 : index
    %39 = vector.load %arg2[%c0_16, %c0_17] : memref<8x128xf32, #tpu.memory_space<vmem>>, vector<8x128xf32>
    tpu.vector_store %arg2[%c0_16, %c0_17], %38 {strides = array<i32>} : memref<8x128xf32, #tpu.memory_space<vmem>>, vector<8x128xf32>,
    return
  }
}

</mosaic_0001>

<llo_original>
// kernel: model_forward.1
$region0: #{model_forward.1}
  #allocation0 [shape = 'u32[]', space=smem, size = 0x4, offset = 0x4, fixed_abs, tag = 'smem constant byte address 0x4 - core index']
  #allocation1 [shape = 'u32[72,128]{1,0:T(1,128)}', space=vmem, size = 0x9000, scoped, tag = 'internal scratch']
  %s0 = inlined_call_operand.vmem [shape: bf16[48,512], index: 0, kind: input, shape index: {}]
  %s1 = inlined_call_operand.vmem [shape: f32[72,128], index: 1, kind: input, shape index: {}]
  %s2 = inlined_call_operand.vmem [shape: f32[8,128], index: 2, kind: output, shape index: {}]
  %s3 = sld [smem:[#allocation0]]
  $region18: #{model_forward.1} parent=0
    _
  %s5 = ssub.s32 1, %s3
  %s6 = scalar_select 0, %s5, %s3
  // Predicated region
  $region2: #{model_forward.1} parent=0 // pred_check
    _
  $region3: #{model_forward.1} parent=0 // pred_check_branch
    %8 = sbr.rel (0) target = $region5
  $region4: #{model_forward.1} parent=0 // pred_region
    _
  $region5: #{model_forward.1} parent=0 // pred_fallthru
    _
  // Predicated region
  $region6: #{model_forward.1} parent=0 // pred_check
    _
  $region7: #{model_forward.1} parent=0 // pred_check_branch
    %10 = sbr.rel (0) target = $region9
  $region8: #{model_forward.1} parent=0 // pred_region
    _
  $region9: #{model_forward.1} parent=0 // pred_fallthru
    _
  %v12 = vld [vmem:[%s1] sm:$0xff]
  %v13 = vpack.c.bf16 %v12, %v12
  %v14 = vld [vmem:[%s0] sm:$0xff]
  %v15 = vld [vmem:[%s0 + $0x8] sm:$0xff]
  %v16 = vld [vmem:[%s0 + $0x10] sm:$0xff]
  %v17 = vld [vmem:[%s0 + $0x18] sm:$0xff]
  %v18 = vld [vmem:[%s0 + $0x20] sm:$0xff]
  %v19 = vld [vmem:[%s0 + $0x28] sm:$0xff]
  %v20 = vld [vmem:[%s0 + $0x30] sm:$0xff]
  %v21 = vld [vmem:[%s0 + $0x38] sm:$0xff]
  %v22 = vld [vmem:[%s0 + $0x40] sm:$0xff]
  %v23 = vld [vmem:[%s0 + $0x48] sm:$0xff]
  %v24 = vld [vmem:[%s0 + $0x50] sm:$0xff]
  %v25 = vld [vmem:[%s0 + $0x58] sm:$0xff]
  %v26 = vld [vmem:[%s1 + $0x8] sm:$0xff]
  %28 = vset.pattern.permute.xlu0 0
  %29 = vperm.xlu0 %28, %v26
  %v30 = vpop.permute.xlu0 %29
  %v44 = vunpack.c.l.b16 %v14
  %v45 = vunpack.c.h.b16 %v14
  %v46 = vunpack.c.l.b16 %v15
  %v47 = vunpack.c.h.b16 %v15
  %v48 = vunpack.c.l.b16 %v16
  %v49 = vunpack.c.h.b16 %v16
  %v50 = vunpack.c.l.b16 %v17
  %v51 = vunpack.c.h.b16 %v17
  %v52 = vunpack.c.l.b16 %v18
  %v53 = vunpack.c.h.b16 %v18
  %v54 = vunpack.c.l.b16 %v19
  %v55 = vunpack.c.h.b16 %v19
  %v56 = vunpack.c.l.b16 %v20
  %v57 = vunpack.c.h.b16 %v20
  %v58 = vunpack.c.l.b16 %v21
  %v59 = vunpack.c.h.b16 %v21
  %v60 = vunpack.c.l.b16 %v22
  %v61 = vunpack.c.h.b16 %v22
  %v62 = vunpack.c.l.b16 %v23
  %v63 = vunpack.c.h.b16 %v23
  %v64 = vunpack.c.l.b16 %v24
  %v65 = vunpack.c.h.b16 %v24
  %v66 = vunpack.c.l.b16 %v25
  %v67 = vunpack.c.h.b16 %v25
  %v68 = vpack.c.b16 %v48, %v44
  %v69 = vpack.c.b16 %v49, %v45
  %v70 = vpack.c.b16 %v50, %v46
  %v71 = vpack.c.b16 %v51, %v47
  %v72 = vpack.c.b16 %v56, %v52
  %v73 = vpack.c.b16 %v57, %v53
  %v74 = vpack.c.b16 %v58, %v54
  %v75 = vpack.c.b16 %v59, %v55
  %v76 = vpack.c.b16 %v64, %v60
  %v77 = vpack.c.b16 %v65, %v61
  %v78 = vpack.c.b16 %v66, %v62
  %v79 = vpack.c.b16 %v67, %v63
  %vm92 = vcmask 392192
  %v94 = vsel %vm92, %v13, 0
  %96 = vmatpush.bf16.msra.mxu0 0
  %97 = vmatpush.bf16.msra.mxu0 0
  %98 = vmatpush.bf16.msra.mxu0 0
  %99 = vmatpush.bf16.msra.mxu0 0
  %100 = vmatpush.bf16.msra.mxu0 0
  %101 = vmatpush.bf16.msra.mxu0 %v76
  %102 = vmatpush.bf16.msra.mxu0 %v72
  %103 = vmatpush.bf16.msra.mxu0 %v68
  %104 = vmatmul.bf16.gmra.mxu0 %v94
  %v105 = vpop.f32.mrf.mxu0
  %v106 = vadd.f32 %v30, %v105
  %v107 = vpop.f32.mrf.mxu0
  %108 = vdwg.mxu0
  %109 = vmatpush.bf16.msra.mxu0 0
  %110 = vmatpush.bf16.msra.mxu0 0
  %111 = vmatpush.bf16.msra.mxu0 0
  %112 = vmatpush.bf16.msra.mxu0 0
  %113 = vmatpush.bf16.msra.mxu0 0
  %114 = vmatpush.bf16.msra.mxu0 %v77
  %115 = vmatpush.bf16.msra.mxu0 %v73
  %116 = vmatpush.bf16.msra.mxu0 %v69
  %117 = vmatmul.bf16.gmra.mxu0 %v94
  %v118 = vpop.f32.mrf.mxu0
  %v119 = vadd.f32 %v30, %v118
  %v120 = vpop.f32.mrf.mxu0
  %121 = vdwg.mxu0
  %122 = vmatpush.bf16.msra.mxu0 0
  %123 = vmatpush.bf16.msra.mxu0 0
  %124 = vmatpush.bf16.msra.mxu0 0
  %125 = vmatpush.bf16.msra.mxu0 0
  %126 = vmatpush.bf16.msra.mxu0 0
  %127 = vmatpush.bf16.msra.mxu0 %v78
  %128 = vmatpush.bf16.msra.mxu0 %v74
  %129 = vmatpush.bf16.msra.mxu0 %v70
  %130 = vmatmul.bf16.gmra.mxu0 %v94
  %v131 = vpop.f32.mrf.mxu0
  %v132 = vadd.f32 %v30, %v131
  %v133 = vpop.f32.mrf.mxu0
  %134 = vdwg.mxu0
  %135 = vmatpush.bf16.msra.mxu0 0
  %136 = vmatpush.bf16.msra.mxu0 0
  %137 = vmatpush.bf16.msra.mxu0 0
  %138 = vmatpush.bf16.msra.mxu0 0
  %139 = vmatpush.bf16.msra.mxu0 0
  %140 = vmatpush.bf16.msra.mxu0 %v79
  %141 = vmatpush.bf16.msra.mxu0 %v75
  %142 = vmatpush.bf16.msra.mxu0 %v71
  %143 = vmatmul.bf16.gmra.mxu0 %v94
  %v144 = vpop.f32.mrf.mxu0
  %v145 = vadd.f32 %v30, %v144
  %v146 = vpop.f32.mrf.mxu0
  %147 = vdwg.mxu0
  %v148 = vmax.f32 %v106, 0.0
  %v149 = vmax.f32 %v119, 0.0
  %v150 = vmax.f32 %v132, 0.0
  %v151 = vmax.f32 %v145, 0.0
  %v152 = vlaneseq
  %v153 = vand.u32 %v152, 127
  %v154 = vadd.s32 %v153, 128
  %v155 = vadd.s32 %v153, 256
  %v156 = vadd.s32 %v153, 384
  %v157 = vlaneseq
  %v158 = vshrl.u32 %v157, 7
  %v159 = vmul.u32 %v158, 196
  %vm160 = vcmp.ge.s32.totalorder %v153, %v159
  %vm161 = vcmp.ge.s32.totalorder %v154, %v159
  %vm162 = vcmp.ge.s32.totalorder %v155, %v159
  %vm163 = vcmp.ge.s32.totalorder %v156, %v159
  %v164 = vadd.s32 %v158, 1
  %v165 = vmul.u32 %v164, 196
  %vm166 = vcmp.lt.s32.totalorder %v153, %v165
  %vm167 = vcmp.lt.s32.totalorder %v154, %v165
  %vm168 = vcmp.lt.s32.totalorder %v155, %v165
  %vm169 = vcmp.lt.s32.totalorder %v156, %v165
  %vm170 = vmand %vm160, %vm166
  %vm171 = vmand %vm161, %vm167
  %vm172 = vmand %vm162, %vm168
  %vm173 = vmand %vm163, %vm169
  %vm174 = vcmp.lt.s32.totalorder %v158, 2
  %vm175 = vmand %vm170, %vm174
  %vm176 = vmand %vm171, %vm174
  %vm177 = vmand %vm172, %vm174
  %vm178 = vmand %vm173, %vm174
  %v179 = vsel %vm175, 0.0051020407, 0.0
  %v180 = vsel %vm176, 0.0051020407, 0.0
  %v181 = vsel %vm177, 0.0051020407, 0.0
  %v182 = vsel %vm178, 0.0051020407, 0.0
  %183 = vmatpush.xpose.msra.mxu0 0.0
  %184 = vmatpush.xpose.msra.mxu0 0.0
  %185 = vmatpush.xpose.msra.mxu0 0.0
  %186 = vmatpush.xpose.msra.mxu0 0.0
  %187 = vmatpush.xpose.msra.mxu0 0.0
  %188 = vmatpush.xpose.msra.mxu0 0.0
  %189 = vmatpush.xpose.msra.mxu0 0.0
  %190 = vmatpush.xpose.msra.mxu0 0.0
  %191 = vmatpush.xpose.msra.mxu0 0.0
  %192 = vmatpush.xpose.msra.mxu0 0.0
  %193 = vmatpush.xpose.msra.mxu0 0.0
  %194 = vmatpush.xpose.msra.mxu0 0.0
  %195 = vmatpush.xpose.msra.mxu0 0.0
  %196 = vmatpush.xpose.msra.mxu0 0.0
  %197 = vmatpush.xpose.msra.mxu0 0.0
  %198 = vmatpush.xpose.msra.mxu0 %v148
  %199 = vmatmul.f32.gmra.mxu0 %v179
  %v200 = vpop.f32.mrf.mxu0
  %v201 = vadd.f32 0.0, %v200
  %202 = vdwg.mxu0
  %203 = vmatpush.xpose.msra.mxu0 0.0
  %204 = vmatpush.xpose.msra.mxu0 0.0
  %205 = vmatpush.xpose.msra.mxu0 0.0
  %206 = vmatpush.xpose.msra.mxu0 0.0
  %207 = vmatpush.xpose.msra.mxu0 0.0
  %208 = vmatpush.xpose.msra.mxu0 0.0
  %209 = vmatpush.xpose.msra.mxu0 0.0
  %210 = vmatpush.xpose.msra.mxu0 0.0
  %211 = vmatpush.xpose.msra.mxu0 0.0
  %212 = vmatpush.xpose.msra.mxu0 0.0
  %213 = vmatpush.xpose.msra.mxu0 0.0
  %214 = vmatpush.xpose.msra.mxu0 0.0
  %215 = vmatpush.xpose.msra.mxu0 0.0
  %216 = vmatpush.xpose.msra.mxu0 0.0
  %217 = vmatpush.xpose.msra.mxu0 0.0
  %218 = vmatpush.xpose.msra.mxu0 %v149
  %219 = vmatmul.f32.gmra.mxu0 %v180
  %v220 = vpop.f32.mrf.mxu0
  %v221 = vadd.f32 %v201, %v220
  %222 = vdwg.mxu0
  %223 = vmatpush.xpose.msra.mxu0 0.0
  %224 = vmatpush.xpose.msra.mxu0 0.0
  %225 = vmatpush.xpose.msra.mxu0 0.0
  %226 = vmatpush.xpose.msra.mxu0 0.0
  %227 = vmatpush.xpose.msra.mxu0 0.0
  %228 = vmatpush.xpose.msra.mxu0 0.0
  %229 = vmatpush.xpose.msra.mxu0 0.0
  %230 = vmatpush.xpose.msra.mxu0 0.0
  %231 = vmatpush.xpose.msra.mxu0 0.0
  %232 = vmatpush.xpose.msra.mxu0 0.0
  %233 = vmatpush.xpose.msra.mxu0 0.0
  %234 = vmatpush.xpose.msra.mxu0 0.0
  %235 = vmatpush.xpose.msra.mxu0 0.0
  %236 = vmatpush.xpose.msra.mxu0 0.0
  %237 = vmatpush.xpose.msra.mxu0 0.0
  %238 = vmatpush.xpose.msra.mxu0 %v150
  %239 = vmatmul.f32.gmra.mxu0 %v181
  %v240 = vpop.f32.mrf.mxu0
  %v241 = vadd.f32 %v221, %v240
  %242 = vdwg.mxu0
  %243 = vmatpush.xpose.msra.mxu0 0.0
  %244 = vmatpush.xpose.msra.mxu0 0.0
  %245 = vmatpush.xpose.msra.mxu0 0.0
  %246 = vmatpush.xpose.msra.mxu0 0.0
  %247 = vmatpush.xpose.msra.mxu0 0.0
  %248 = vmatpush.xpose.msra.mxu0 0.0
  %249 = vmatpush.xpose.msra.mxu0 0.0
  %250 = vmatpush.xpose.msra.mxu0 0.0
  %251 = vmatpush.xpose.msra.mxu0 0.0
  %252 = vmatpush.xpose.msra.mxu0 0.0
  %253 = vmatpush.xpose.msra.mxu0 0.0
  %254 = vmatpush.xpose.msra.mxu0 0.0
  %255 = vmatpush.xpose.msra.mxu0 0.0
  %256 = vmatpush.xpose.msra.mxu0 0.0
  %257 = vmatpush.xpose.msra.mxu0 0.0
  %258 = vmatpush.xpose.msra.mxu0 %v151
  %259 = vmatmul.f32.gmra.mxu0 %v182
  %v260 = vpop.f32.mrf.mxu0
  %v261 = vadd.f32 %v241, %v260
  %262 = vdwg.mxu0
  %v263 = vld [vmem:[%s1 + $0x10] sm:$0xff]
  %v264 = vld [vmem:[%s1 + $0x18] sm:$0x1]
  %v265 = vperm.slane %v264, 0
  %vm266 = vcmask 64512
  %v268 = vsel %vm266, %v261, 0
  %270 = vmatpush.msra.mxu0 0.0
  %271 = vmatpush.msra.mxu0 0.0
  %272 = vmatpush.msra.mxu0 0.0
  %273 = vmatpush.msra.mxu0 0.0
  %274 = vmatpush.msra.mxu0 0.0
  %275 = vmatpush.msra.mxu0 0.0
  %276 = vmatpush.msra.mxu0 0.0
  %277 = vmatpush.msra.mxu0 0.0
  %278 = vmatpush.msra.mxu0 0.0
  %279 = vmatpush.msra.mxu0 0.0
  %280 = vmatpush.msra.mxu0 0.0
  %281 = vmatpush.msra.mxu0 0.0
  %282 = vmatpush.msra.mxu0 0.0
  %283 = vmatpush.msra.mxu0 0.0
  %284 = vmatpush.msra.mxu0 0.0
  %285 = vmatpush.msra.mxu0 %v263
  %286 = vmatmul.f32.gmra.mxu0 %v268
  %v287 = vpop.f32.mrf.mxu0
  %v288 = vadd.f32 %v265, %v287
  %289 = vdwg.mxu0
  %v290 = vmax.f32 %v288, 0.0
  %v291 = vld [vmem:[%s1 + $0x20] sm:$0xff]
  %v292 = vld [vmem:[%s1 + $0x28] sm:$0xff]
  %v293 = vld [vmem:[%s1 + $0x30] sm:$0xff]
  %v294 = vld [vmem:[%s1 + $0x38] sm:$0xff]
  %v295 = vld [vmem:[%s1 + $0x40] sm:$0x1]
  %v296 = vperm.slane %v295, 0
  %vm297 = vcmask 261120
  %v299 = vsel %vm297, %v290, 0
  %301 = vmatpush.msra.mxu0 0.0
  %302 = vmatpush.msra.mxu0 0.0
  %303 = vmatpush.msra.mxu0 0.0
  %304 = vmatpush.msra.mxu0 0.0
  %305 = vmatpush.msra.mxu0 0.0
  %306 = vmatpush.msra.mxu0 0.0
  %307 = vmatpush.msra.mxu0 0.0
  %308 = vmatpush.msra.mxu0 0.0
  %309 = vmatpush.msra.mxu0 0.0
  %310 = vmatpush.msra.mxu0 0.0
  %311 = vmatpush.msra.mxu0 0.0
  %312 = vmatpush.msra.mxu0 0.0
  %313 = vmatpush.msra.mxu0 %v294
  %314 = vmatpush.msra.mxu0 %v293
  %315 = vmatpush.msra.mxu0 %v292
  %316 = vmatpush.msra.mxu0 %v291
  %317 = vmatmul.f32.gmra.mxu0 %v299
  %v318 = vpop.f32.mrf.mxu0
  %v319 = vadd.f32 %v296, %v318
  %320 = vdwg.mxu0
  %321 = vst [vmem:[%s2] sm:$0xff] %v319
  // Predicated region
  $region10: #{model_forward.1} parent=0 // pred_check
    _
  $region11: #{model_forward.1} parent=0 // pred_check_branch
    %323 = sbr.rel (0) target = $region13
  $region12: #{model_forward.1} parent=0 // pred_region
    _
  $region13: #{model_forward.1} parent=0 // pred_fallthru
    _
  // Predicated region
  $region14: #{model_forward.1} parent=0 // pred_check
    _
  $region15: #{model_forward.1} parent=0 // pred_check_branch
    %325 = sbr.rel (0) target = $region17
  $region16: #{model_forward.1} parent=0 // pred_region
    _
  $region17: #{model_forward.1} parent=0 // pred_fallthru
    _

</llo_original>
